<compile_context>
chip_gen: v7x
topology: tpu7x:2x2x1
jax: 0.10.0
libtpu: 0.0.40
codegen_flags: <defaults>
</compile_context>

<pallas_src>
import functools
import math

import jax
import jax.numpy as jnp
from jax.experimental import pallas as pl
from jax.experimental.pallas import tpu as pltpu


# Leave headroom below the smallest physical VMEM across generations (64 MiB on v7x).
_VMEM_LIMIT_BYTES = 48 * 1024 * 1024


def _pick_tile(dim, preferred):
    """Largest candidate tile that exactly divides `dim`; otherwise the full dim.

    Candidates are multiples of 128 (lane width / MXU) and 8 (sublanes), so any
    returned tile satisfies the (8, 128) BlockSpec constraint; the fallback is
    the full dimension, which is always allowed.
    """
    for t in preferred:
        if t <= dim and dim % t == 0:
            return t
    return dim


# --------------------------------------------------------------------------
# Tiled linear projection:  out = x @ W + b
#   grid = (M/tm, N/tn, K/tk), f32 accumulator in VMEM, bias added on the
#   last K step.
# --------------------------------------------------------------------------
def _linear_kernel(x_ref, w_ref, b_ref, o_ref, acc_ref):
    @pl.when(pl.program_id(2) == 0)
    def _():
        acc_ref[...] = jnp.zeros_like(acc_ref)

    acc_ref[...] += jnp.dot(x_ref[...], w_ref[...],
                            preferred_element_type=jnp.float32)

    @pl.when(pl.program_id(2) == pl.num_programs(2) - 1)
    def _():
        o_ref[...] = (acc_ref[...] + b_ref[...].astype(jnp.float32)).astype(o_ref.dtype)


def linear(x, w, b):
    """x: (M, K) @ w: (K, N) + b: (N,) -> (M, N)."""
    M, K = x.shape
    N = w.shape[1]
    tm = _pick_tile(M, (512, 256, 128))
    tn = _pick_tile(N, (512, 256, 128))
    tk = _pick_tile(K, (1024, 512, 256, 128))
    grid = (M // tm, N // tn, K // tk)

    return pl.pallas_call(
        _linear_kernel,
        out_shape=jax.ShapeDtypeStruct((M, N), x.dtype),
        grid=grid,
        in_specs=[
            pl.BlockSpec((tm, tk), lambda i, j, k: (i, k)),
            pl.BlockSpec((tk, tn), lambda i, j, k: (k, j)),
            pl.BlockSpec((1, tn), lambda i, j, k: (0, j)),
        ],
        out_specs=pl.BlockSpec((tm, tn), lambda i, j, k: (i, j)),
        scratch_shapes=[pltpu.VMEM((tm, tn), jnp.float32)],
        compiler_params=pltpu.CompilerParams(
            dimension_semantics=("parallel", "parallel", "arbitrary"),
            vmem_limit_bytes=_VMEM_LIMIT_BYTES,
        ),
    )(x, w, b.reshape(1, N))


# --------------------------------------------------------------------------
# Fused QKV projection (self-attention): reads x once, writes q/k/v directly.
#   grid = (M/tm, N/tn, K/tk), three f32 accumulators in VMEM.
# --------------------------------------------------------------------------
def _qkv_linear_kernel(x_ref, wq_ref, wk_ref, wv_ref, bq_ref, bk_ref, bv_ref,
                       q_ref, k_ref, v_ref, acc_q, acc_k, acc_v):
    @pl.when(pl.program_id(2) == 0)
    def _():
        acc_q[...] = jnp.zeros_like(acc_q)
        acc_k[...] = jnp.zeros_like(acc_k)
        acc_v[...] = jnp.zeros_like(acc_v)

    x = x_ref[...]
    acc_q[...] += jnp.dot(x, wq_ref[...], preferred_element_type=jnp.float32)
    acc_k[...] += jnp.dot(x, wk_ref[...], preferred_element_type=jnp.float32)
    acc_v[...] += jnp.dot(x, wv_ref[...], preferred_element_type=jnp.float32)

    @pl.when(pl.program_id(2) == pl.num_programs(2) - 1)
    def _():
        q_ref[...] = (acc_q[...] + bq_ref[...].astype(jnp.float32)).astype(q_ref.dtype)
        k_ref[...] = (acc_k[...] + bk_ref[...].astype(jnp.float32)).astype(k_ref.dtype)
        v_ref[...] = (acc_v[...] + bv_ref[...].astype(jnp.float32)).astype(v_ref.dtype)


def qkv_linear(x, wq, bq, wk, bk, wv, bv):
    """x: (M, K); each w: (K, N), b: (N,) -> (q, k, v) each (M, N)."""
    M, K = x.shape
    N = wq.shape[1]
    tm = _pick_tile(M, (512, 256, 128))
    tn = _pick_tile(N, (512, 256, 128))
    tk = _pick_tile(K, (512, 256, 128))
    grid = (M // tm, N // tn, K // tk)

    x_spec = pl.BlockSpec((tm, tk), lambda i, j, k: (i, k))
    w_spec = pl.BlockSpec((tk, tn), lambda i, j, k: (k, j))
    b_spec = pl.BlockSpec((1, tn), lambda i, j, k: (0, j))
    o_spec = pl.BlockSpec((tm, tn), lambda i, j, k: (i, j))

    out_sds = jax.ShapeDtypeStruct((M, N), x.dtype)
    return pl.pallas_call(
        _qkv_linear_kernel,
        out_shape=(out_sds, out_sds, out_sds),
        grid=grid,
        in_specs=[x_spec, w_spec, w_spec, w_spec, b_spec, b_spec, b_spec],
        out_specs=(o_spec, o_spec, o_spec),
        scratch_shapes=[pltpu.VMEM((tm, tn), jnp.float32)] * 3,
        compiler_params=pltpu.CompilerParams(
            dimension_semantics=("parallel", "parallel", "arbitrary"),
            vmem_limit_bytes=_VMEM_LIMIT_BYTES,
        ),
    )(x, wq, wk, wv, bq.reshape(1, N), bk.reshape(1, N), bv.reshape(1, N))


# --------------------------------------------------------------------------
# Flash-style attention with in-kernel head split/merge.
#   grid = (B, Sq/tq, Skv/tk); q/k/v blocks: (1, tile, D); the head split
#   (tile, D) -> (H, tile, depth) happens on-chip; the output is written back
#   merged as (1, tq, D) (lane-dense, no extra XLA transpose passes).
# --------------------------------------------------------------------------
def _split_heads_block(x2d, num_heads):
    """(t, D) -> (H, t, depth)."""
    t, d_model = x2d.shape
    depth = d_model // num_heads
    return jnp.transpose(x2d.reshape(t, num_heads, depth), (1, 0, 2))


def _softmax_init(q_ref, q_sc, m_sc, l_sc, acc_sc, num_heads):
    m_sc[...] = jnp.full_like(m_sc, -jnp.inf)
    l_sc[...] = jnp.zeros_like(l_sc)
    acc_sc[...] = jnp.zeros_like(acc_sc)
    # q block is resident across the KV axis: split heads once, keep in VMEM.
    q_sc[...] = _split_heads_block(q_ref[0], num_heads)


def _online_softmax_step(s, v, m_sc, l_sc, acc_sc):
    # s: (H, tq, tk) f32 scores for this KV tile; v: (H, tk, depth) native dtype.
    m_prev = m_sc[...]
    m_new = jnp.maximum(m_prev, jnp.max(s, axis=-1, keepdims=True))
    alpha = jnp.exp(m_prev - m_new)
    p = jnp.exp(s - m_new)
    l_sc[...] = alpha * l_sc[...] + jnp.sum(p, axis=-1, keepdims=True)
    acc_sc[...] = alpha * acc_sc[...] + jnp.einsum(
        "hqk,hkd->hqd", p.astype(v.dtype), v,
        preferred_element_type=jnp.float32)
    m_sc[...] = m_new


def _softmax_finalize(ki, o_ref, l_sc, acc_sc):
    @pl.when(ki == pl.num_programs(2) - 1)
    def _():
        inv_l = pl.reciprocal(l_sc[...], approx=True)      # EUP slot, ~free
        ctx = acc_sc[...] * inv_l                          # (H, tq, depth) f32
        h, tq, depth = ctx.shape
        merged = jnp.transpose(ctx, (1, 0, 2)).reshape(tq, h * depth)
        o_ref[0] = merged.astype(o_ref.dtype)


def _flash_attn_kernel(q_ref, k_ref, v_ref, o_ref,
                       q_sc, m_sc, l_sc, acc_sc, *, num_heads):
    ki = pl.program_id(2)

    @pl.when(ki == 0)
    def _():
        _softmax_init(q_ref, q_sc, m_sc, l_sc, acc_sc, num_heads)

    k = _split_heads_block(k_ref[0], num_heads)            # (H, tk, depth)
    v = _split_heads_block(v_ref[0], num_heads)            # (H, tk, depth)
    s = jnp.einsum("hqd,hkd->hqk", q_sc[...], k,           # no explicit k.T
                   preferred_element_type=jnp.float32)     # (H, tq, tk) f32
    _online_softmax_step(s, v, m_sc, l_sc, acc_sc)
    _softmax_finalize(ki, o_ref, l_sc, acc_sc)


def _flash_attn_kernel_masked(q_ref, k_ref, v_ref, mask_ref, o_ref,
                              q_sc, m_sc, l_sc, acc_sc, *, num_heads):
    ki = pl.program_id(2)

    @pl.when(ki == 0)
    def _():
        _softmax_init(q_ref, q_sc, m_sc, l_sc, acc_sc, num_heads)

    k = _split_heads_block(k_ref[0], num_heads)
    v = _split_heads_block(v_ref[0], num_heads)
    s = jnp.einsum("hqd,hkd->hqk", q_sc[...], k,
                   preferred_element_type=jnp.float32)
    # PyTorch semantics: scores += mask * -1e9  (mask == 1 means "masked out").
    s = s + mask_ref[0, 0][None, :, :] * (-1e9)
    _online_softmax_step(s, v, m_sc, l_sc, acc_sc)
    _softmax_finalize(ki, o_ref, l_sc, acc_sc)


def attention(q, k, v, num_heads, mask=None):
    """q: (B, Sq, D); k, v: (B, Skv, D); the 1/sqrt(depth) scale is assumed to
    have been folded into the Q projection. Returns the merged-head context
    (B, Sq, D)."""
    B, Sq, D = q.shape
    Skv = k.shape[1]
    depth = D // num_heads
    tq = _pick_tile(Sq, (256, 128))
    tk = _pick_tile(Skv, (512, 256, 128))
    grid = (B, Sq // tq, Skv // tk)

    q_spec = pl.BlockSpec((1, tq, D), lambda b, qi, ki: (b, qi, 0))
    kv_spec = pl.BlockSpec((1, tk, D), lambda b, qi, ki: (b, ki, 0))
    out_spec = pl.BlockSpec((1, tq, D), lambda b, qi, ki: (b, qi, 0))
    scratch = [
        pltpu.VMEM((num_heads, tq, depth), q.dtype),   # q, pre-split, resident
        pltpu.VMEM((num_heads, tq, 1), jnp.float32),   # running row max
        pltpu.VMEM((num_heads, tq, 1), jnp.float32),   # running denominator
        pltpu.VMEM((num_heads, tq, depth), jnp.float32),  # output accumulator
    ]
    cparams = pltpu.CompilerParams(
        dimension_semantics=("parallel", "parallel", "arbitrary"),
        vmem_limit_bytes=_VMEM_LIMIT_BYTES,
    )
    out_shape = jax.ShapeDtypeStruct((B, Sq, D), q.dtype)

    if mask is None:
        kern = functools.partial(_flash_attn_kernel, num_heads=num_heads)
        return pl.pallas_call(
            kern, out_shape=out_shape, grid=grid,
            in_specs=[q_spec, kv_spec, kv_spec], out_specs=out_spec,
            scratch_shapes=scratch, compiler_params=cparams,
        )(q, k, v)

    mask = jnp.broadcast_to(mask, (B, 1, Sq, Skv)).astype(jnp.float32)
    mask_spec = pl.BlockSpec((1, 1, tq, tk), lambda b, qi, ki: (b, 0, qi, ki))
    kern = functools.partial(_flash_attn_kernel_masked, num_heads=num_heads)
    return pl.pallas_call(
        kern, out_shape=out_shape, grid=grid,
        in_specs=[q_spec, kv_spec, kv_spec, mask_spec], out_specs=out_spec,
        scratch_shapes=scratch, compiler_params=cparams,
    )(q, k, v, mask)


# --------------------------------------------------------------------------
# Module-equivalent wrapper
# --------------------------------------------------------------------------
def init_params(key, d_model):
    """Parameter init mirroring the four nn.Linear(d_model, d_model)."""
    keys = jax.random.split(key, 8)
    lim = 1.0 / math.sqrt(d_model)

    def lin(kw, kb):
        w = jax.random.uniform(kw, (d_model, d_model), jnp.float32, -lim, lim)
        b = jax.random.uniform(kb, (d_model,), jnp.float32, -lim, lim)
        return w, b

    return {
        "wq": lin(keys[0], keys[1]),
        "wk": lin(keys[2], keys[3]),
        "wv": lin(keys[4], keys[5]),
        "wo": lin(keys[6], keys[7]),
    }


def split_heads(x, num_heads):
    B, S, D = x.shape
    depth = D // num_heads
    return x.reshape(B, S, num_heads, depth).transpose(0, 2, 1, 3)  # (B, H, S, depth)


def multi_head_attention(params, query, key, value, num_heads, mask=None):
    B, Sq, D = query.shape
    Skv = key.shape[1]
    depth = D // num_heads

    # Fold the 1/sqrt(depth) score scaling into the Q projection (tiny one-time
    # D*D op on weights); mathematically identical to scaling the scores.
    scale = 1.0 / math.sqrt(depth)
    wq = params["wq"][0] * scale
    bq = params["wq"][1] * scale

    if key is query and value is query:
        # Self-attention: read the activations from HBM once and run the three
        # projections in a single kernel with three outputs (no split pass).
        q2d, k2d, v2d = qkv_linear(query.reshape(-1, D), wq, bq,
                                   params["wk"][0], params["wk"][1],
                                   params["wv"][0], params["wv"][1])
    else:
        q2d = linear(query.reshape(-1, D), wq, bq)
        k2d = linear(key.reshape(-1, D), *params["wk"])
        v2d = linear(value.reshape(-1, D), *params["wv"])

    q = q2d.reshape(B, Sq, D)
    k = k2d.reshape(B, Skv, D)
    v = v2d.reshape(B, Skv, D)

    # Head split / merge happens inside the attention kernel (no XLA transposes).
    ctx = attention(q, k, v, num_heads, mask)              # (B, Sq, D)
    return linear(ctx.reshape(-1, D), *params["wo"]).reshape(B, Sq, D)


# --------------------------------------------------------------------------
# Pure-JAX reference (correctness check)
# --------------------------------------------------------------------------
def reference_mha(params, query, key, value, num_heads, mask=None):
    B, Sq, D = query.shape
    depth = D // num_heads
    q = query @ params["wq"][0] + params["wq"][1]
    k = key @ params["wk"][0] + params["wk"][1]
    v = value @ params["wv"][0] + params["wv"][1]
    qh = split_heads(q, num_heads)
    kh = split_heads(k, num_heads)
    vh = split_heads(v, num_heads)
    scores = jnp.einsum("bhqd,bhkd->bhqk", qh, kh) / jnp.sqrt(jnp.float32(depth))
    if mask is not None:
        scores = scores + mask * (-1e9)
    w = jax.nn.softmax(scores, axis=-1)
    ctx = jnp.einsum("bhqk,bhkd->bhqd", w, vh)
    ctx = ctx.transpose(0, 2, 1, 3).reshape(B, Sq, D)
    return ctx @ params["wo"][0] + params["wo"][1]


if __name__ == "__main__":
    batch, seq_len, d_model, num_heads = 2, 16, 64, 8

    root = jax.random.PRNGKey(0)
    kq, kk, kv, kp = jax.random.split(root, 4)
    query = jax.random.normal(kq, (batch, seq_len, d_model), jnp.float32)
    key_in = jax.random.normal(kk, (batch, seq_len, d_model), jnp.float32)
    value = jax.random.normal(kv, (batch, seq_len, d_model), jnp.float32)
    params = init_params(kp, d_model)

    # 1) Distinct q/k/v (cross-attention style), no mask.
    out = multi_head_attention(params, query, key_in, value, num_heads, mask=None)
    out = jax.block_until_ready(out)
    ref = reference_mha(params, query, key_in, value, num_heads, mask=None)
    assert out.shape == (batch, seq_len, d_model)
    assert jnp.allclose(out, ref, atol=3e-2, rtol=3e-2), "mismatch (no mask)"

    # 2) Self-attention (exercises the fused 3-output QKV projection) with a
    #    causal mask (mask == 1 means "masked out", matching the PyTorch module).
    causal = (jnp.arange(seq_len)[None, :] > jnp.arange(seq_len)[:, None])
    causal = causal.astype(jnp.float32)[None, None]        # (1, 1, S, S)
    out_m = multi_head_attention(params, query, query, query, num_heads, mask=causal)
    out_m = jax.block_until_ready(out_m)
    ref_m = reference_mha(params, query, query, query, num_heads, mask=causal)
    assert jnp.allclose(out_m, ref_m, atol=3e-2, rtol=3e-2), "mismatch (masked self-attn)"

    print("KERNEL_OK")
</pallas_src>

<mosaic_0001>
module attributes {stable_mosaic.version = 11 : i64} {
  func.func @_linear_kernel(%arg0: i32, %arg1: i32, %arg2: i32, %arg3: memref<32x64xf32, #tpu.memory_space<vmem>>, %arg4: memref<64x64xf32, #tpu.memory_space<vmem>>, %arg5: memref<1x64xf32, #tpu.memory_space<vmem>>, %arg6: memref<32x64xf32, #tpu.memory_space<vmem>>, %arg7: memref<32x64xf32, #tpu.memory_space<vmem>>) attributes {dimension_semantics = [#tpu.dimension_semantics<parallel>, #tpu.dimension_semantics<parallel>, #tpu.dimension_semantics<arbitrary>], iteration_bounds = array<i64: 1, 1, 1>, scalar_prefetch = 0 : i64, scratch_operands = 1 : i64, tpu.core_type = #tpu.core_type<tc>, window_params = [{transform_indices = @transform_0, window_bounds = array<i64: 32, 64>}, {transform_indices = @transform_1, window_bounds = array<i64: 64, 64>}, {transform_indices = @transform_2, window_bounds = array<i64: 1, 64>}, {transform_indices = @transform_3, window_bounds = array<i64: 32, 64>}]} {
    %c0_i32 = arith.constant 0 : i32
    %0 = arith.cmpi eq, %arg2, %c0_i32 : i32
    %1 = arith.extui %0 : i1 to i32
    %c0_i32_0 = arith.constant 0 : i32
    %2 = arith.cmpi ne, %1, %c0_i32_0 : i32
    scf.if %2 {
      %cst_10 = arith.constant 0.000000e+00 : f32
      %12 = vector.broadcast %cst_10 : f32 to vector<32x64xf32>
      %c0_11 = arith.constant 0 : index
      %c0_12 = arith.constant 0 : index
      %13 = vector.load %arg7[%c0_11, %c0_12] : memref<32x64xf32, #tpu.memory_space<vmem>>, vector<32x64xf32>
      tpu.vector_store %arg7[%c0_11, %c0_12], %12 {strides = array<i32>} : memref<32x64xf32, #tpu.memory_space<vmem>>, vector<32x64xf32>,
    } else {
    }
    %c0 = arith.constant 0 : index
    %c0_1 = arith.constant 0 : index
    %3 = vector.load %arg7[%c0, %c0_1] : memref<32x64xf32, #tpu.memory_space<vmem>>, vector<32x64xf32>
    %c0_2 = arith.constant 0 : index
    %c0_3 = arith.constant 0 : index
    %4 = vector.load %arg3[%c0_2, %c0_3] : memref<32x64xf32, #tpu.memory_space<vmem>>, vector<32x64xf32>
    %c0_4 = arith.constant 0 : index
    %c0_5 = arith.constant 0 : index
    %5 = vector.load %arg4[%c0_4, %c0_5] : memref<64x64xf32, #tpu.memory_space<vmem>>, vector<64x64xf32>
    %cst = arith.constant dense<0.000000e+00> : vector<32x64xf32>
    %6 = tpu.matmul %4, %5, %cst {dimension_numbers = #tpu.dot_dimension_numbers<[1], [0], [0], [1], [0, 0, 1, 1], [], []>} : vector<32x64xf32>, vector<64x64xf32>, vector<32x64xf32> -> vector<32x64xf32>
    %7 = arith.addf %3, %6 : vector<32x64xf32>
    %c0_6 = arith.constant 0 : index
    %c0_7 = arith.constant 0 : index
    %8 = vector.load %arg7[%c0_6, %c0_7] : memref<32x64xf32, #tpu.memory_space<vmem>>, vector<32x64xf32>
    tpu.vector_store %arg7[%c0_6, %c0_7], %7 {strides = array<i32>} : memref<32x64xf32, #tpu.memory_space<vmem>>, vector<32x64xf32>,
    %c0_i32_8 = arith.constant 0 : i32
    %9 = arith.cmpi eq, %arg2, %c0_i32_8 : i32
    %10 = arith.extui %9 : i1 to i32
    %c0_i32_9 = arith.constant 0 : i32
    %11 = arith.cmpi ne, %10, %c0_i32_9 : i32
    scf.if %11 {
      %c0_10 = arith.constant 0 : index
      %c0_11 = arith.constant 0 : index
      %12 = vector.load %arg7[%c0_10, %c0_11] : memref<32x64xf32, #tpu.memory_space<vmem>>, vector<32x64xf32>
      %c0_12 = arith.constant 0 : index
      %c0_13 = arith.constant 0 : index
      %13 = vector.load %arg5[%c0_12, %c0_13] : memref<1x64xf32, #tpu.memory_space<vmem>>, vector<1x64xf32>
      %14 = vector.broadcast %13 : vector<1x64xf32> to vector<32x64xf32>
      %15 = arith.addf %12, %14 : vector<32x64xf32>
      %c0_14 = arith.constant 0 : index
      %c0_15 = arith.constant 0 : index
      %16 = vector.load %arg6[%c0_14, %c0_15] : memref<32x64xf32, #tpu.memory_space<vmem>>, vector<32x64xf32>
      tpu.vector_store %arg6[%c0_14, %c0_15], %15 {strides = array<i32>} : memref<32x64xf32, #tpu.memory_space<vmem>>, vector<32x64xf32>,
    } else {
    }
    return
  }
  func.func @transform_0(%arg0: i32, %arg1: i32, %arg2: i32) -> (i32, i32) {
    %c0_i32 = arith.constant 0 : i32
    return %arg0, %arg2 : i32, i32
  }
  func.func @transform_1(%arg0: i32, %arg1: i32, %arg2: i32) -> (i32, i32) {
    %c0_i32 = arith.constant 0 : i32
    return %arg2, %arg1 : i32, i32
  }
  func.func @transform_2(%arg0: i32, %arg1: i32, %arg2: i32) -> (i32, i32) {
    %c0_i32 = arith.constant 0 : i32
    %c0_i32_0 = arith.constant 0 : i32
    return %c0_i32, %arg1 : i32, i32
  }
  func.func @transform_3(%arg0: i32, %arg1: i32, %arg2: i32) -> (i32, i32) {
    %c0_i32 = arith.constant 0 : i32
    return %arg0, %arg1 : i32, i32
  }
}

</mosaic_0001>

<llo_original>
// kernel: tpu_custom_call.1
$region0: #{tpu_custom_call.1}
  #allocation0 [shape = 'u32[]', space=smem, size = 0x4, offset = 0x4, fixed_abs, tag = 'smem constant byte address 0x4 - core index']
  #allocation1 [shape = 'u32[144,128]{1,0:T(1,128)}', space=vmem, size = 0x12000, scoped, tag = 'internal scratch']
  #allocation2 [shape = 'f32[32,64]{1,0:T(8,128)}', space=vmem, size = 0x4000, scoped, tag = 'scratch operand']
  %s0 = inlined_call_operand.hbm [shape: f32[32,64], index: 0, kind: input, shape index: {}]
  %s1 = inlined_call_operand.hbm [shape: f32[64,64], index: 1, kind: input, shape index: {}]
  %s2 = inlined_call_operand.vmem [shape: f32[1,64], index: 2, kind: input, shape index: {}]
  %s3 = inlined_call_operand.hbm [shape: f32[32,64], index: 3, kind: output, shape index: {}]
  %s4 = sld [smem:[#allocation0]]
  $region38: #{tpu_custom_call.1} parent=0
    _
  %s6 = ssub.s32 1, %s4
  %s7 = scalar_select 0, %s6, %s4
  $region1: #{tpu_custom_call.1} parent=0
    #allocation3 [shape = 'u8[16384]{0}', space=vmem, size = 0x4000, scoped, tag = 'input window, operand 0, single buffered']
    #allocation4 [shape = 's32[1]{0}', space=sflag, size = 0x4, scoped, tag = 'scoped memory for tpu_custom_call.1']
    #allocation5 [shape = 's32[1]{0}', space=sflag, size = 0x4, scoped, tag = 'scoped memory for tpu_custom_call.1']
    #allocation6 [shape = 'u8[32768]{0}', space=vmem, size = 0x8000, scoped, tag = 'input window, operand 1, single buffered']
    #allocation7 [shape = 's32[1]{0}', space=sflag, size = 0x4, scoped, tag = 'scoped memory for tpu_custom_call.1']
    #allocation8 [shape = 'u8[16384]{0}', space=vmem, size = 0x4000, scoped, tag = 'output window, operand 0, single buffered']
    %8 = vsyncpa [#allocation4], 0
    %9 = vsyncpa [#allocation7], 0
    %10 = vsyncpa [#allocation5], 0
    // Predicated region
    $region2: #{tpu_custom_call.1} parent=1 // pred_check
      _
    $region3: #{tpu_custom_call.1} parent=1 // pred_check_branch
      %12 = sbr.rel (0) target = $region5
    $region4: #{tpu_custom_call.1} parent=1 // pred_region
      %s14 = ssub.s32 512, 512
      %15 = vsyncadd [#allocation4], %s14
      %s16 = sshll.u32 [#allocation3], 4
      %s17 = int_to_ptr.vmem [resolvable:$true] %s16
      %22 = dma.hbm_to_vmem [thread:$0]  %s0, 512, %s17, [#allocation4], 128, 128, 8
    $region5: #{tpu_custom_call.1} parent=1 // pred_fallthru
      _
    // Predicated region
    $region6: #{tpu_custom_call.1} parent=1 // pred_check
      _
    $region7: #{tpu_custom_call.1} parent=1 // pred_check_branch
      %24 = sbr.rel (0) target = $region9
    $region8: #{tpu_custom_call.1} parent=1 // pred_region
      %s26 = ssub.s32 1024, 1024
      %27 = vsyncadd [#allocation7], %s26
      %s28 = sshll.u32 [#allocation6], 4
      %s29 = int_to_ptr.vmem [resolvable:$true] %s28
      %34 = dma.hbm_to_vmem [thread:$0]  %s1, 1024, %s29, [#allocation7], 128, 128, 8
    $region9: #{tpu_custom_call.1} parent=1 // pred_fallthru
      _
    // Predicated region
    $region10: #{tpu_custom_call.1} parent=1 // pred_check
      _
    $region11: #{tpu_custom_call.1} parent=1 // pred_check_branch
      %36 = sbr.rel (0) target = $region13
    $region12: #{tpu_custom_call.1} parent=1 // pred_region
      _
    $region13: #{tpu_custom_call.1} parent=1 // pred_fallthru
      _
    // Predicated region
    $region14: #{tpu_custom_call.1} parent=1 // pred_check
      _
    $region15: #{tpu_custom_call.1} parent=1 // pred_check_branch
      %38 = sbr.rel (0) target = $region17
    $region16: #{tpu_custom_call.1} parent=1 // pred_region
      %39 = dma.done [#allocation4], 512
    $region17: #{tpu_custom_call.1} parent=1 // pred_fallthru
      _
    // Predicated region
    $region18: #{tpu_custom_call.1} parent=1 // pred_check
      _
    $region19: #{tpu_custom_call.1} parent=1 // pred_check_branch
      %41 = sbr.rel (0) target = $region21
    $region20: #{tpu_custom_call.1} parent=1 // pred_region
      %42 = dma.done [#allocation7], 1024
    $region21: #{tpu_custom_call.1} parent=1 // pred_fallthru
      _
    %p43 = scmp.eq.s32.totalorder 0, 0
    // Predicated region
    $region22: #{tpu_custom_call.1} parent=1 // pred_check
      %p44 = pneg %p43
    $region23: #{tpu_custom_call.1} parent=1 // pred_check_branch
      %46 = sbr.rel (%p44) target = $region25
    $region24: #{tpu_custom_call.1} parent=1 // pred_region
      %vm47 = vcmask 523264
      %48 = vst.msk [vmem:[#allocation2] sm:$0xff] %vm47, 0.0
      %49 = vst.msk [vmem:[#allocation2 + $0x8] sm:$0xff] %vm47, 0.0
      %50 = vst.msk [vmem:[#allocation2 + $0x10] sm:$0xff] %vm47, 0.0
      %51 = vst.msk [vmem:[#allocation2 + $0x18] sm:$0xff] %vm47, 0.0
    $region25: #{tpu_custom_call.1} parent=1 // pred_fallthru
      _
    %v52 = vld [vmem:[#allocation2] sm:$0xff]
    %v53 = vld [vmem:[#allocation2 + $0x8] sm:$0xff]
    %v54 = vld [vmem:[#allocation2 + $0x10] sm:$0xff]
    %v55 = vld [vmem:[#allocation2 + $0x18] sm:$0xff]
    %v56 = vld [vmem:[#allocation3] sm:$0xff]
    %v57 = vld [vmem:[#allocation3 + $0x8] sm:$0xff]
    %v58 = vld [vmem:[#allocation3 + $0x10] sm:$0xff]
    %v59 = vld [vmem:[#allocation3 + $0x18] sm:$0xff]
    %v60 = vld [vmem:[#allocation6] sm:$0xff]
    %v61 = vld [vmem:[#allocation6 + $0x8] sm:$0xff]
    %v62 = vld [vmem:[#allocation6 + $0x10] sm:$0xff]
    %v63 = vld [vmem:[#allocation6 + $0x18] sm:$0xff]
    %v64 = vld [vmem:[#allocation6 + $0x20] sm:$0xff]
    %v65 = vld [vmem:[#allocation6 + $0x28] sm:$0xff]
    %v66 = vld [vmem:[#allocation6 + $0x30] sm:$0xff]
    %v67 = vld [vmem:[#allocation6 + $0x38] sm:$0xff]
    %vm68 = vcmask 523264
    %v70 = vsel %vm68, %v56, 0
    %v73 = vsel %vm68, %v57, 0
    %v76 = vsel %vm68, %v58, 0
    %v79 = vsel %vm68, %v59, 0
    %81 = vmatprep.subr.mxu0 0.0
    %82 = vmatpush1.msra.mxu0 %v60
    %83 = vmatprep.subr.mxu0 0.0
    %84 = vmatpush1.msra.mxu0 %v61
    %85 = vmatprep.subr.mxu0 0.0
    %86 = vmatpush1.msra.mxu0 %v62
    %87 = vmatprep.subr.mxu0 0.0
    %88 = vmatpush1.msra.mxu0 %v63
    %89 = vmatprep.subr.mxu0 0.0
    %90 = vmatpush1.msra.mxu0 %v64
    %91 = vmatprep.subr.mxu0 0.0
    %92 = vmatpush1.msra.mxu0 %v65
    %93 = vmatprep.subr.mxu0 0.0
    %94 = vmatpush1.msra.mxu0 %v66
    %95 = vmatprep.subr.mxu0 0.0
    %96 = vmatpush1.msra.mxu0 %v67
    %97 = vmatprep.subr.mxu0 0.0
    %98 = vmatpush1.msra.mxu0 0.0
    %99 = vmatprep.subr.mxu0 0.0
    %100 = vmatpush1.msra.mxu0 0.0
    %101 = vmatprep.subr.mxu0 0.0
    %102 = vmatpush1.msra.mxu0 0.0
    %103 = vmatprep.subr.mxu0 0.0
    %104 = vmatpush1.msra.mxu0 0.0
    %105 = vmatprep.subr.mxu0 0.0
    %106 = vmatpush1.msra.mxu0 0.0
    %107 = vmatprep.subr.mxu0 0.0
    %108 = vmatpush1.msra.mxu0 0.0
    %109 = vmatprep.subr.mxu0 0.0
    %110 = vmatpush1.msra.mxu0 0.0
    %111 = vmatprep.subr.mxu0 0.0
    %112 = vmatpush1.msra.mxu0 0.0
    %113 = vmatprep.subr.mxu0 0.0
    %114 = vmatpush1.msra.mxu0 0.0
    %115 = vmatprep.subr.mxu0 0.0
    %116 = vmatpush1.msra.mxu0 0.0
    %117 = vmatprep.subr.mxu0 0.0
    %118 = vmatpush1.msra.mxu0 0.0
    %119 = vmatprep.subr.mxu0 0.0
    %120 = vmatpush1.msra.mxu0 0.0
    %121 = vmatprep.subr.mxu0 0.0
    %122 = vmatpush1.msra.mxu0 0.0
    %123 = vmatprep.subr.mxu0 0.0
    %124 = vmatpush1.msra.mxu0 0.0
    %125 = vmatprep.subr.mxu0 0.0
    %126 = vmatpush1.msra.mxu0 0.0
    %127 = vmatprep.subr.mxu0 0.0
    %128 = vmatpush1.msra.mxu0 0.0
    %129 = vmatprep.subr.mxu0 0.0
    %130 = vmatpush1.msra.mxu0 0.0
    %131 = vmatprep.subr.mxu0 0.0
    %132 = vmatpush1.msra.mxu0 0.0
    %133 = vmatprep.subr.mxu0 0.0
    %134 = vmatpush1.msra.mxu0 0.0
    %135 = vmatprep.subr.mxu0 0.0
    %136 = vmatpush1.msra.mxu0 0.0
    %137 = vmatprep.subr.mxu0 0.0
    %138 = vmatpush1.msra.mxu0 0.0
    %139 = vmatprep.subr.mxu0 0.0
    %140 = vmatpush1.msra.mxu0 0.0
    %141 = vmatprep.subr.mxu0 0.0
    %142 = vmatpush1.msra.mxu0 0.0
    %143 = vmatprep.subr.mxu0 0.0
    %144 = vmatpush1.msra.mxu0 0.0
    %145 = vmatprep.mubr.f32.mxu0 0.0
    %146 = vmatmul.mubr.f32.gmra.mrb[0].mxu0 %v70
    %v147 = vpop.f32.mrb[0].mxu0
    %v148 = vadd.f32 0.0, %v147
    %v149 = vpop.f32.mrb[0].mxu0
    %150 = vmatprep.mubr.f32.mxu0 0.0
    %151 = vmatmul.mubr.f32.gmra.mrb[0].mxu0 %v73
    %v152 = vpop.f32.mrb[0].mxu0
    %v153 = vadd.f32 0.0, %v152
    %v154 = vpop.f32.mrb[0].mxu0
    %155 = vmatprep.mubr.f32.mxu0 0.0
    %156 = vmatmul.mubr.f32.gmra.mrb[0].mxu0 %v76
    %v157 = vpop.f32.mrb[0].mxu0
    %v158 = vadd.f32 0.0, %v157
    %v159 = vpop.f32.mrb[0].mxu0
    %160 = vmatprep.mubr.f32.mxu0 0.0
    %161 = vmatmul.mubr.f32.gmra.mrb[0].mxu0 %v79
    %v162 = vpop.f32.mrb[0].mxu0
    %v163 = vadd.f32 0.0, %v162
    %v164 = vpop.f32.mrb[0].mxu0
    %165 = vdwg.mxu0
    %v166 = vadd.f32 %v52, %v148
    %v167 = vadd.f32 %v53, %v153
    %v168 = vadd.f32 %v54, %v158
    %v169 = vadd.f32 %v55, %v163
    %170 = vst.msk [vmem:[#allocation2] sm:$0xff] %vm68, %v166
    %171 = vst.msk [vmem:[#allocation2 + $0x8] sm:$0xff] %vm68, %v167
    %172 = vst.msk [vmem:[#allocation2 + $0x10] sm:$0xff] %vm68, %v168
    %173 = vst.msk [vmem:[#allocation2 + $0x18] sm:$0xff] %vm68, %v169
    // Predicated region
    $region26: #{tpu_custom_call.1} parent=1 // pred_check
      %p174 = pneg %p43
    $region27: #{tpu_custom_call.1} parent=1 // pred_check_branch
      %176 = sbr.rel (%p174) target = $region29
    $region28: #{tpu_custom_call.1} parent=1 // pred_region
      %v177 = vld [vmem:[#allocation2] sm:$0xff]
      %v178 = vld [vmem:[#allocation2 + $0x8] sm:$0xff]
      %v179 = vld [vmem:[#allocation2 + $0x10] sm:$0xff]
      %v180 = vld [vmem:[#allocation2 + $0x18] sm:$0xff]
      %v181 = vld [vmem:[%s2] sm:$0x1]
      %v183 = vlaneseq
      %v184 = vshrl.u32 %v183, 7
      %v185 = vsub.s32 0, %v184
      %v186 = vrot.slane %v181, %v185
      %v188 = vadd.f32 %v177, %v186
      %v189 = vadd.f32 %v178, %v186
      %v190 = vadd.f32 %v179, %v186
      %v191 = vadd.f32 %v180, %v186
      %192 = vst.msk [vmem:[#allocation8] sm:$0xff] %vm68, %v188
      %193 = vst.msk [vmem:[#allocation8 + $0x8] sm:$0xff] %vm68, %v189
      %194 = vst.msk [vmem:[#allocation8 + $0x10] sm:$0xff] %vm68, %v190
      %195 = vst.msk [vmem:[#allocation8 + $0x18] sm:$0xff] %vm68, %v191
    $region29: #{tpu_custom_call.1} parent=1 // pred_fallthru
      _
    // Predicated region
    $region30: #{tpu_custom_call.1} parent=1 // pred_check
      _
    $region31: #{tpu_custom_call.1} parent=1 // pred_check_branch
      %197 = sbr.rel (0) target = $region33
    $region32: #{tpu_custom_call.1} parent=1 // pred_region
      %s199 = ssub.s32 512, 512
      %200 = vsyncadd [#allocation5], %s199
      %s201 = sshll.u32 [#allocation8], 4
      %s202 = int_to_ptr.vmem [resolvable:$true] %s201
      %207 = dma.vmem_to_hbm [thread:$0]  %s202, 512, %s3, [#allocation5], 128, 128, 8
    $region33: #{tpu_custom_call.1} parent=1 // pred_fallthru
      _
    // Predicated region
    $region34: #{tpu_custom_call.1} parent=1 // pred_check
      _
    $region35: #{tpu_custom_call.1} parent=1 // pred_check_branch
      %209 = sbr.rel (0) target = $region37
    $region36: #{tpu_custom_call.1} parent=1 // pred_region
      %210 = dma.done [#allocation5], 512
    $region37: #{tpu_custom_call.1} parent=1 // pred_fallthru
      _
    %211 = vsyncpa [#allocation4], 1
    %212 = vsyncpa [#allocation7], 1
    %213 = vsyncpa [#allocation5], 1

</llo_original>
